<compile_context>
chip_gen: v6e
topology: v6e:2x2x1
jax: 0.10.0
libtpu: 0.0.40
codegen_flags: <defaults>
</compile_context>

<pallas_src>
import functools

import jax
import jax.numpy as jnp
from jax.experimental import pallas as pl
from jax.experimental.pallas import tpu as pltpu


def _round_up(x, m):
    return ((x + m - 1) // m) * m


def _tpu_vmem_bytes():
    """Physical VMEM per TensorCore; conservative fallback if the query fails."""
    try:
        info = pltpu.get_tpu_info()
        for name in ("vmem_capacity_bytes", "vmem_size_bytes", "vmem_bytes"):
            v = getattr(info, name, None)
            if v:
                return int(v)
    except Exception:
        pass
    return 64 << 20  # v7x-class (smallest) -> safe everywhere


def _pick_chunk(H, target, align=128):
    """Largest divisor of H that is <= target, preferring multiples of `align`."""
    if H <= target:
        return H
    divisors = [d for d in range(1, H + 1) if H % d == 0 and d <= target]
    aligned = [d for d in divisors if d % align == 0]
    if aligned:
        return max(aligned)
    return max(divisors)  # always contains 1


def _vmem_estimate(tb, th1, D_in_p, H2, D_out, itemsize):
    """Estimate VMEM use including (sublane, lane) layout padding, 2x buffering."""
    lane, f32 = 128, 4
    row_cd = max(8, 32 // itemsize)  # sublane tile rows for the compute dtype
    p = _round_up
    est = 0
    est += 2 * p(tb, row_cd) * p(D_in_p, lane) * itemsize      # x tile
    est += 2 * p(D_in_p, row_cd) * p(th1, lane) * itemsize     # w1 chunk
    est += 2 * p(1, 8) * p(th1, lane) * f32                    # b1 chunk
    est += 2 * p(th1, row_cd) * p(H2, lane) * itemsize         # w2 chunk
    est += 2 * p(1, 8) * p(H2, lane) * f32                     # b2
    est += 2 * p(H2, row_cd) * p(D_out, lane) * itemsize       # w3 (lane-padded!)
    est += 2 * p(1, 8) * p(D_out, lane) * f32                  # b3
    est += 2 * p(tb, 8) * p(D_out, lane) * f32                 # out tile (lane-padded)
    est += p(tb, 8) * p(H2, lane) * f32                        # fc2 f32 accumulator scratch
    return est


def deepsynergy_kernel(x_ref, w1_ref, b1_ref, w2_ref, b2_ref, w3_ref, b3_ref,
                       o_ref, acc_ref):
    """One (batch-tile i, H1-chunk j) grid step of the fused MLP.

    fc1(+folded BN1)+ReLU is computed for H1 chunk j and immediately contracted
    against the matching rows of w2, accumulating into acc_ref (f32).  On the last
    chunk the fc2-bias(+folded BN2)+ReLU, fc3 and log_softmax epilogue runs and the
    output tile is stored.  Dropout layers are identity (eval mode).
    """
    j = pl.program_id(1)

    @pl.when(j == 0)
    def _():
        acc_ref[...] = jnp.zeros_like(acc_ref)

    # fc1 chunk + folded BN1 + ReLU   (drop_in = identity in eval)
    h1 = jnp.dot(x_ref[...], w1_ref[...], preferred_element_type=jnp.float32)
    h1 = jnp.maximum(h1 + b1_ref[...], 0.0).astype(w2_ref.dtype)

    # partial fc2: contract this H1 chunk against the matching rows of w2
    acc_ref[...] += jnp.dot(h1, w2_ref[...], preferred_element_type=jnp.float32)

    @pl.when(j == pl.num_programs(1) - 1)
    def _():
        # fc2 bias + folded BN2 + ReLU   (drop = identity in eval)
        h2 = jnp.maximum(acc_ref[...] + b2_ref[...], 0.0).astype(w3_ref.dtype)
        # fc3 + log_softmax(dim=-1).  D_out=2 -> masked partial store; negligible.
        logits = jnp.dot(h2, w3_ref[...], preferred_element_type=jnp.float32) + b3_ref[...]
        m = jnp.max(logits, axis=-1, keepdims=True)
        z = logits - m
        lse = jnp.log(jnp.sum(jnp.exp(z), axis=-1, keepdims=True))
        o_ref[...] = (z - lse).astype(o_ref.dtype)


@functools.partial(jax.jit, static_argnames=("tb", "th1", "compute_dtype"))
def deepsynergy_forward(x, params, tb=None, th1=None, compute_dtype=jnp.bfloat16):
    """x: (B, D_in) float32.  params: dict of pre-transposed, BN-folded weights."""
    B, D_in = x.shape
    w1, b1 = params["w1"], params["b1"]
    w2, b2 = params["w2"], params["b2"]
    w3, b3 = params["w3"], params["b3"]
    H1, H2, D_out = w1.shape[1], w2.shape[1], w3.shape[1]
    cd = compute_dtype
    itemsize = jnp.dtype(cd).itemsize

    # --- pad D_in to a lane multiple (zero cols in x, zero rows in w1) -----------
    D_in_p = _round_up(D_in, 128)
    if D_in_p != D_in:
        x = jnp.pad(x, ((0, 0), (0, D_in_p - D_in)))
        w1 = jnp.pad(w1, ((0, D_in_p - D_in), (0, 0)))

    # --- generation-aware VMEM budget --------------------------------------------
    vmem_phys = _tpu_vmem_bytes()
    small_vmem = vmem_phys <= (96 << 20)              # v7x-class (64 MiB per TC)
    budget = int(vmem_phys * (0.55 if small_vmem else 0.70))

    # --- batch tile: prefer nb == 1 (weights streamed from HBM exactly once) -----
    row_align = 8 if itemsize >= 4 else max(8, 32 // itemsize)   # 8 f32, 16 bf16
    per_row = 2 * D_in_p * itemsize + 2 * 128 * 4 + H2 * 4       # x tile + out tile + acc
    if tb is None:
        tb_cap = max(row_align, ((budget // 2) // per_row) // row_align * row_align)
        tb_full = _round_up(B, row_align)
        if tb_full <= tb_cap:
            tb = tb_full                                          # single batch tile
        elif tb_cap >= 256:
            tb = (tb_cap // 256) * 256                            # MXU-aligned tiles
        else:
            tb = tb_cap
        # TODO(synk): when nb > 1 weights are re-streamed per batch tile; a
        # weights-outer/batch-inner restructuring would avoid that.

    # --- H1 reduction chunk: largest divisor of H1 fitting the remaining budget --
    if th1 is None:
        const_bytes = (2 * 8 * _round_up(H2, 128) * 4
                       + 2 * _round_up(H2, 8) * 128 * itemsize
                       + 2 * 8 * 128 * 4)
        rem = max(budget - tb * per_row - const_bytes, 4 << 20)
        per_h1 = 2 * D_in_p * itemsize + 2 * H2 * itemsize + 2 * 8 * 4
        th1 = _pick_chunk(H1, max(128, rem // per_h1), align=128)
    assert H1 % th1 == 0, "th1 must divide H1"

    # --- pad ragged batch (trailing rows must not be dropped) ---------------------
    B_pad = _round_up(B, tb)
    if B_pad != B:
        x = jnp.pad(x, ((0, B_pad - B), (0, 0)))
    nb, nh = B_pad // tb, H1 // th1

    # --- operand dtypes: low-precision weights/activations, f32 accumulate/bias ---
    xc = x.astype(cd)
    w1c, w2c, w3c = w1.astype(cd), w2.astype(cd), w3.astype(cd)
    b1f, b2f, b3f = b1.astype(jnp.float32), b2.astype(jnp.float32), b3.astype(jnp.float32)

    # --- scoped VMEM limit from a padding-aware estimate --------------------------
    est = _vmem_estimate(tb, th1, D_in_p, H2, D_out, itemsize)
    cap = (52 << 20) if small_vmem else (100 << 20)
    vmem_limit = int(min(cap, max(32 << 20, int(1.4 * est) + (4 << 20))))

    # --- advisory cost estimate (lets XLA overlap the wrapper casts/pads/slice) ---
    flops = 2 * B_pad * (D_in_p * H1 + H1 * H2 + H2 * D_out)
    bytes_accessed = (B_pad * D_in_p * itemsize
                      + nb * (D_in_p * H1 + H1 * H2 + H2 * D_out) * itemsize
                      + (H1 + H2 + D_out) * 4
                      + B_pad * D_out * 4)
    cost = pl.CostEstimate(flops=int(flops),
                           transcendentals=int(B_pad * (D_out + 1)),
                           bytes_accessed=int(bytes_accessed))

    const2 = lambda i, j: (0, 0)
    out = pl.pallas_call(
        deepsynergy_kernel,
        out_shape=jax.ShapeDtypeStruct((B_pad, D_out), jnp.float32),
        grid_spec=pltpu.PrefetchScalarGridSpec(
            num_scalar_prefetch=0,
            grid=(nb, nh),
            in_specs=[
                pl.BlockSpec((tb, D_in_p), lambda i, j: (i, 0)),    # x tile
                pl.BlockSpec((D_in_p, th1), lambda i, j: (0, j)),   # w1 chunk (BN1-folded)
                pl.BlockSpec((1, th1), lambda i, j: (0, j)),        # fc1 folded bias chunk
                pl.BlockSpec((th1, H2), lambda i, j: (j, 0)),       # w2 chunk (BN2-folded)
                pl.BlockSpec((1, H2), const2),                      # fc2 folded bias
                pl.BlockSpec((H2, D_out), const2),                  # w3
                pl.BlockSpec((1, D_out), const2),                   # fc3 bias
            ],
            out_specs=pl.BlockSpec((tb, D_out), lambda i, j: (i, 0)),
            scratch_shapes=[pltpu.VMEM((tb, H2), jnp.float32)],     # fc2 accumulator
        ),
        compiler_params=pltpu.CompilerParams(
            # batch axis is NOT megacore-sharded: at these sizes the kernel is
            # weight-streaming bound and splitting batch doubles HBM weight bytes.
            dimension_semantics=("arbitrary", "arbitrary"),
            vmem_limit_bytes=vmem_limit),
        cost_estimate=cost,
    )(xc, w1c, b1f, w2c, b2f, w3c, b3f)

    return out[:B] if B_pad != B else out


def init_params(key, D_in, H1, H2, D_out, eps=1e-5):
    """Matches DeepSynergy._init_weights: xavier_normal_ Linear weights, biases
    ~ U(-1, 0); BatchNorm1d at default init with eval-mode running stats
    (gamma=1, beta=0, mean=0, var=1).  The eval-mode BN affine is folded into the
    preceding Linear once, host-side:
        scale = gamma / sqrt(var + eps);  shift = beta - mean * scale
        W' = W * scale (per output column);  b' = b * scale + shift
    """
    ks = jax.random.split(key, 6)

    def xavier_normal_t(k, fan_in, fan_out):
        std = (2.0 / (fan_in + fan_out)) ** 0.5
        # PyTorch stores (out, in); keep the pre-transposed (in, out) layout.
        return (jax.random.normal(k, (fan_out, fan_in), jnp.float32) * std).T

    w1 = xavier_normal_t(ks[0], D_in, H1)
    w2 = xavier_normal_t(ks[1], H1, H2)
    w3 = xavier_normal_t(ks[2], H2, D_out)
    b1 = jax.random.uniform(ks[3], (1, H1), jnp.float32, minval=-1.0, maxval=0.0)
    b2 = jax.random.uniform(ks[4], (1, H2), jnp.float32, minval=-1.0, maxval=0.0)
    b3 = jax.random.uniform(ks[5], (1, D_out), jnp.float32, minval=-1.0, maxval=0.0)

    def fold(w, b, H):
        gamma = jnp.ones((1, H), jnp.float32)
        beta = jnp.zeros((1, H), jnp.float32)
        mean = jnp.zeros((1, H), jnp.float32)
        var = jnp.ones((1, H), jnp.float32)
        scale = gamma / jnp.sqrt(var + eps)
        shift = beta - mean * scale
        return w * scale, b * scale + shift

    w1, b1 = fold(w1, b1, H1)
    w2, b2 = fold(w2, b2, H2)
    return dict(w1=w1, b1=b1, w2=w2, b2=b2, w3=w3, b3=b3)


def reference_forward(x, p, compute_dtype=jnp.float32):
    """Pure-JAX reference with the same operand dtypes as the kernel
    (BN folded, eval-mode dropout = identity, f32 accumulation)."""
    cd = compute_dtype
    h1 = jnp.maximum(
        jnp.dot(x.astype(cd), p["w1"].astype(cd), preferred_element_type=jnp.float32)
        + p["b1"], 0.0).astype(cd)
    h2 = jnp.maximum(
        jnp.dot(h1, p["w2"].astype(cd), preferred_element_type=jnp.float32)
        + p["b2"], 0.0).astype(cd)
    logits = jnp.dot(h2, p["w3"].astype(cd), preferred_element_type=jnp.float32) + p["b3"]
    return jax.nn.log_softmax(logits, axis=-1)


if __name__ == "__main__":
    # Small shapes consistent with the module structure (Linear/BN/Linear/BN/Linear).
    # D_in=200 is intentionally ragged to exercise the lane-padding path.
    D_in, H1, H2, D_out = 200, 512, 256, 2

    key = jax.random.PRNGKey(0)
    k_x, k_p = jax.random.split(key)
    params = init_params(k_p, D_in, H1, H2, D_out)

    # --- Test 1: fp32 operands, explicit tiles (exercises batch + H1-reduction axes).
    B = 16
    x = jax.random.normal(k_x, (B, D_in), jnp.float32)
    out = jax.block_until_ready(
        deepsynergy_forward(x, params, tb=8, th1=H1 // 2, compute_dtype=jnp.float32))
    ref = reference_forward(x, params, jnp.float32)
    assert out.shape == (B, D_out)
    assert jnp.allclose(out, ref, atol=1e-4, rtol=1e-4), "fp32 mismatch vs reference"

    # --- Test 2: default bf16 operands + ragged batch (padding path, auto tiles).
    B2 = 13
    x2 = jax.random.normal(k_x, (B2, D_in), jnp.float32)
    out2 = jax.block_until_ready(deepsynergy_forward(x2, params))
    ref2 = reference_forward(x2, params, jnp.bfloat16)
    assert out2.shape == (B2, D_out)
    assert jnp.allclose(out2, ref2, atol=3e-2, rtol=3e-2), "bf16 mismatch vs reference"

    # TODO(synk): train-mode BatchNorm (batch statistics) and stochastic Dropout are
    # not reproduced; this kernel implements eval-mode forward semantics only.
    print("KERNEL_OK")
</pallas_src>

<mosaic_0001>
module attributes {stable_mosaic.version = 11 : i64} {
  func.func @deepsynergy_kernel(%arg0: i32, %arg1: i32, %arg2: memref<8x256xf32, #tpu.memory_space<vmem>>, %arg3: memref<256x256xf32, #tpu.memory_space<vmem>>, %arg4: memref<1x256xf32, #tpu.memory_space<vmem>>, %arg5: memref<256x256xf32, #tpu.memory_space<vmem>>, %arg6: memref<1x256xf32, #tpu.memory_space<vmem>>, %arg7: memref<256x2xf32, #tpu.memory_space<vmem>>, %arg8: memref<1x2xf32, #tpu.memory_space<vmem>>, %arg9: memref<8x2xf32, #tpu.memory_space<vmem>>, %arg10: memref<8x256xf32, #tpu.memory_space<vmem>>) attributes {dimension_semantics = [#tpu.dimension_semantics<arbitrary>, #tpu.dimension_semantics<arbitrary>], iteration_bounds = array<i64: 2, 2>, scalar_prefetch = 0 : i64, scratch_operands = 1 : i64, tpu.core_type = #tpu.core_type<tc>, window_params = [{transform_indices = @transform_0, window_bounds = array<i64: 8, 256>}, {transform_indices = @transform_1, window_bounds = array<i64: 256, 256>}, {transform_indices = @transform_2, window_bounds = array<i64: 1, 256>}, {transform_indices = @transform_3, window_bounds = array<i64: 256, 256>}, {pipeline_mode = #tpu.pipeline_mode<synchronous>, transform_indices = @transform_4, window_bounds = array<i64: 1, 256>}, {pipeline_mode = #tpu.pipeline_mode<synchronous>, transform_indices = @transform_5, window_bounds = array<i64: 256, 2>}, {pipeline_mode = #tpu.pipeline_mode<synchronous>, transform_indices = @transform_6, window_bounds = array<i64: 1, 2>}, {transform_indices = @transform_7, window_bounds = array<i64: 8, 2>}]} {
    %c0_i32 = arith.constant 0 : i32
    %0 = arith.cmpi eq, %arg1, %c0_i32 : i32
    %1 = arith.extui %0 : i1 to i32
    %c0_i32_0 = arith.constant 0 : i32
    %2 = arith.cmpi ne, %1, %c0_i32_0 : i32
    scf.if %2 {
      %cst_15 = arith.constant 0.000000e+00 : f32
      %19 = vector.broadcast %cst_15 : f32 to vector<8x256xf32>
      %c0_16 = arith.constant 0 : index
      %c0_17 = arith.constant 0 : index
      %20 = vector.load %arg10[%c0_16, %c0_17] : memref<8x256xf32, #tpu.memory_space<vmem>>, vector<8x256xf32>
      tpu.vector_store %arg10[%c0_16, %c0_17], %19 {strides = array<i32>} : memref<8x256xf32, #tpu.memory_space<vmem>>, vector<8x256xf32>,
    } else {
    }
    %c0 = arith.constant 0 : index
    %c0_1 = arith.constant 0 : index
    %3 = vector.load %arg2[%c0, %c0_1] : memref<8x256xf32, #tpu.memory_space<vmem>>, vector<8x256xf32>
    %c0_2 = arith.constant 0 : index
    %c0_3 = arith.constant 0 : index
    %4 = vector.load %arg3[%c0_2, %c0_3] : memref<256x256xf32, #tpu.memory_space<vmem>>, vector<256x256xf32>
    %cst = arith.constant dense<0.000000e+00> : vector<8x256xf32>
    %5 = tpu.matmul %3, %4, %cst {dimension_numbers = #tpu.dot_dimension_numbers<[1], [0], [0], [1], [0, 0, 1, 1], [], []>} : vector<8x256xf32>, vector<256x256xf32>, vector<8x256xf32> -> vector<8x256xf32>
    %c0_4 = arith.constant 0 : index
    %c0_5 = arith.constant 0 : index
    %6 = vector.load %arg4[%c0_4, %c0_5] : memref<1x256xf32, #tpu.memory_space<vmem>>, vector<1x256xf32>
    %7 = vector.broadcast %6 : vector<1x256xf32> to vector<8x256xf32>
    %8 = arith.addf %5, %7 : vector<8x256xf32>
    %cst_6 = arith.constant 0.000000e+00 : f32
    %9 = vector.broadcast %cst_6 : f32 to vector<8x256xf32>
    %10 = arith.maximumf %8, %9 : vector<8x256xf32>
    %c0_7 = arith.constant 0 : index
    %c0_8 = arith.constant 0 : index
    %11 = vector.load %arg10[%c0_7, %c0_8] : memref<8x256xf32, #tpu.memory_space<vmem>>, vector<8x256xf32>
    %c0_9 = arith.constant 0 : index
    %c0_10 = arith.constant 0 : index
    %12 = vector.load %arg5[%c0_9, %c0_10] : memref<256x256xf32, #tpu.memory_space<vmem>>, vector<256x256xf32>
    %cst_11 = arith.constant dense<0.000000e+00> : vector<8x256xf32>
    %13 = tpu.matmul %10, %12, %cst_11 {dimension_numbers = #tpu.dot_dimension_numbers<[1], [0], [0], [1], [0, 0, 1, 1], [], []>} : vector<8x256xf32>, vector<256x256xf32>, vector<8x256xf32> -> vector<8x256xf32>
    %14 = arith.addf %11, %13 : vector<8x256xf32>
    %c0_12 = arith.constant 0 : index
    %c0_13 = arith.constant 0 : index
    %15 = vector.load %arg10[%c0_12, %c0_13] : memref<8x256xf32, #tpu.memory_space<vmem>>, vector<8x256xf32>
    tpu.vector_store %arg10[%c0_12, %c0_13], %14 {strides = array<i32>} : memref<8x256xf32, #tpu.memory_space<vmem>>, vector<8x256xf32>,
    %c1_i32 = arith.constant 1 : i32
    %16 = arith.cmpi eq, %arg1, %c1_i32 : i32
    %17 = arith.extui %16 : i1 to i32
    %c0_i32_14 = arith.constant 0 : i32
    %18 = arith.cmpi ne, %17, %c0_i32_14 : i32
    scf.if %18 {
      %c0_15 = arith.constant 0 : index
      %c0_16 = arith.constant 0 : index
      %19 = vector.load %arg10[%c0_15, %c0_16] : memref<8x256xf32, #tpu.memory_space<vmem>>, vector<8x256xf32>
      %c0_17 = arith.constant 0 : index
      %c0_18 = arith.constant 0 : index
      %20 = vector.load %arg6[%c0_17, %c0_18] : memref<1x256xf32, #tpu.memory_space<vmem>>, vector<1x256xf32>
      %21 = vector.broadcast %20 : vector<1x256xf32> to vector<8x256xf32>
      %22 = arith.addf %19, %21 : vector<8x256xf32>
      %cst_19 = arith.constant 0.000000e+00 : f32
      %23 = vector.broadcast %cst_19 : f32 to vector<8x256xf32>
      %24 = arith.maximumf %22, %23 : vector<8x256xf32>
      %c0_20 = arith.constant 0 : index
      %c0_21 = arith.constant 0 : index
      %25 = vector.load %arg7[%c0_20, %c0_21] : memref<256x2xf32, #tpu.memory_space<vmem>>, vector<256x2xf32>
      %cst_22 = arith.constant dense<0.000000e+00> : vector<8x2xf32>
      %26 = tpu.matmul %24, %25, %cst_22 {dimension_numbers = #tpu.dot_dimension_numbers<[1], [0], [0], [1], [0, 0, 1, 1], [], []>} : vector<8x256xf32>, vector<256x2xf32>, vector<8x2xf32> -> vector<8x2xf32>
      %c0_23 = arith.constant 0 : index
      %c0_24 = arith.constant 0 : index
      %27 = vector.load %arg8[%c0_23, %c0_24] : memref<1x2xf32, #tpu.memory_space<vmem>>, vector<1x2xf32>
      %28 = vector.broadcast %27 : vector<1x2xf32> to vector<8x2xf32>
      %29 = arith.addf %26, %28 : vector<8x2xf32>
      %cst_25 = arith.constant dense<0xFF800000> : vector<8xf32>
      %30 = vector.multi_reduction <maximumf>, %29, %cst_25 [1] : vector<8x2xf32> to vector<8xf32>
      %31 = vector.shape_cast %30 : vector<8xf32> to vector<8x1xf32>
      %32 = vector.broadcast %31 : vector<8x1xf32> to vector<8x2xf32>
      %33 = arith.subf %29, %32 : vector<8x2xf32>
      %34 = math.exp %33 : vector<8x2xf32>
      %cst_26 = arith.constant dense<0.000000e+00> : vector<8xf32>
      %35 = vector.multi_reduction <add>, %34, %cst_26 [1] : vector<8x2xf32> to vector<8xf32>
      %36 = vector.shape_cast %35 : vector<8xf32> to vector<8x1xf32>
      %37 = math.log %36 : vector<8x1xf32>
      %38 = vector.broadcast %37 : vector<8x1xf32> to vector<8x2xf32>
      %39 = arith.subf %33, %38 : vector<8x2xf32>
      %c0_27 = arith.constant 0 : index
      %c0_28 = arith.constant 0 : index
      %40 = vector.load %arg9[%c0_27, %c0_28] : memref<8x2xf32, #tpu.memory_space<vmem>>, vector<8x2xf32>
      tpu.vector_store %arg9[%c0_27, %c0_28], %39 {strides = array<i32>} : memref<8x2xf32, #tpu.memory_space<vmem>>, vector<8x2xf32>,
    } else {
    }
    return
  }
  func.func @transform_0(%arg0: i32, %arg1: i32) -> (i32, i32) {
    %c0_i32 = arith.constant 0 : i32
    %c0_i32_0 = arith.constant 0 : i32
    return %arg0, %c0_i32 : i32, i32
  }
  func.func @transform_1(%arg0: i32, %arg1: i32) -> (i32, i32) {
    %c0_i32 = arith.constant 0 : i32
    %c0_i32_0 = arith.constant 0 : i32
    return %c0_i32, %arg1 : i32, i32
  }
  func.func @transform_2(%arg0: i32, %arg1: i32) -> (i32, i32) {
    %c0_i32 = arith.constant 0 : i32
    %c0_i32_0 = arith.constant 0 : i32
    return %c0_i32, %arg1 : i32, i32
  }
  func.func @transform_3(%arg0: i32, %arg1: i32) -> (i32, i32) {
    %c0_i32 = arith.constant 0 : i32
    %c0_i32_0 = arith.constant 0 : i32
    return %arg1, %c0_i32 : i32, i32
  }
  func.func @transform_4(%arg0: i32, %arg1: i32) -> (i32, i32) {
    %c0_i32 = arith.constant 0 : i32
    %c0_i32_0 = arith.constant 0 : i32
    %c0_i32_1 = arith.constant 0 : i32
    return %c0_i32, %c0_i32_0 : i32, i32
  }
  func.func @transform_5(%arg0: i32, %arg1: i32) -> (i32, i32) {
    %c0_i32 = arith.constant 0 : i32
    %c0_i32_0 = arith.constant 0 : i32
    %c0_i32_1 = arith.constant 0 : i32
    return %c0_i32, %c0_i32_0 : i32, i32
  }
  func.func @transform_6(%arg0: i32, %arg1: i32) -> (i32, i32) {
    %c0_i32 = arith.constant 0 : i32
    %c0_i32_0 = arith.constant 0 : i32
    %c0_i32_1 = arith.constant 0 : i32
    return %c0_i32, %c0_i32_0 : i32, i32
  }
  func.func @transform_7(%arg0: i32, %arg1: i32) -> (i32, i32) {
    %c0_i32 = arith.constant 0 : i32
    %c0_i32_0 = arith.constant 0 : i32
    return %arg0, %c0_i32 : i32, i32
  }
}

</mosaic_0001>

<llo_original>
// kernel: deepsynergy_forward.1
$region0: #{deepsynergy_forward.1}
  #allocation0 [shape = 'u32[]', space=smem, size = 0x4, offset = 0x4, fixed_abs, tag = 'smem constant byte address 0x4 - core index']
  #allocation1 [shape = 'u32[144,128]{1,0:T(1,128)}', space=vmem, size = 0x12000, scoped, tag = 'internal scratch']
  #allocation2 [shape = 'f32[8,256]{1,0:T(8,128)}', space=vmem, size = 0x2000, scoped, tag = 'scratch operand']
  %s0 = inlined_call_operand.vmem [shape: f32[16,256], index: 0, kind: input, shape index: {}]
  %s1 = inlined_call_operand.vmem [shape: f32[256,512], index: 1, kind: input, shape index: {}]
  %s2 = inlined_call_operand.vmem [shape: f32[1,512], index: 2, kind: input, shape index: {}]
  %s3 = inlined_call_operand.vmem [shape: f32[512,256], index: 3, kind: input, shape index: {}]
  %s4 = inlined_call_operand.vmem [shape: f32[1,256], index: 4, kind: input, shape index: {}]
  %s5 = inlined_call_operand.vmem [shape: f32[256,2], index: 5, kind: input, shape index: {}]
  %s6 = inlined_call_operand.vmem [shape: f32[1,2], index: 6, kind: input, shape index: {}]
  %s7 = inlined_call_operand.vmem [shape: f32[16,2], index: 7, kind: output, shape index: {}]
  %s8 = sld [smem:[#allocation0]]
  $region92: #{deepsynergy_forward.1} parent=0
    _
  %s10 = ssub.s32 1, %s8
  %s11 = scalar_select 0, %s10, %s8
  $region1: #{deepsynergy_forward.1} parent=0
    #allocation3 [shape = 'u8[524288]{0}', space=vmem, size = 0x80000, scoped, tag = 'input window, operand 1']
    loop: start=0, step=1, limit=6
    $region2: #{deepsynergy_forward.1} parent=1 // loop_pre_header
      _
    $region3: #{deepsynergy_forward.1} parent=1 // loop_header
      %s13 = sphi 0, %s17
      %p14 = scmp.ge.s32.totalorder %s13, 6
      %s20 = sphi 0, %s32
      %s21 = sphi 0, %s28
      %s22 = sphi 0, %s20
      %s23 = sphi 0, %s21
      %s24 = sphi 0, %s22
      %s25 = sphi 0, %s23
      %s35 = sphi 0, %s37
      %s38 = sphi 0, %s35
      %s39 = sphi 0, %s38
      %s55 = sphi 0, %s39
      %s61 = sphi 0, %s63
      %s64 = sphi 0, %s61
      %s65 = sphi 0, %s64
      %s81 = sphi 0, %s65
      %s87 = sphi 0, %s89
      %s90 = sphi 0, %s87
      %s91 = sphi 0, %s90
      %s107 = sphi 0, %s91
      %s113 = sphi 0, %s115
      %s116 = sphi 0, %s113
      %s117 = sphi 0, %s116
      %s133 = sphi 0, %s117
      %s137 = sphi 0, %s137
      %s139 = sphi 0, %s137
      %s140 = sphi 0, %s139
      %s154 = sphi 0, %s140
      %s158 = sphi 0, %s158
      %s160 = sphi 0, %s158
      %s161 = sphi 0, %s160
      %s175 = sphi 0, %s161
      %s179 = sphi 0, %s179
      %s181 = sphi 0, %s179
      %s182 = sphi 0, %s181
      %s196 = sphi 0, %s182
      %s202 = sphi 0, %s204
      %s205 = sphi 0, %s202
      %s206 = sphi 0, %s205
      %s222 = sphi 0, %s206
    $region4: #{deepsynergy_forward.1} parent=1 // loop_header_branch
      %16 = sbr.rel (%p14) target = $region8
    $region5: #{deepsynergy_forward.1} parent=1 // loop_body
      %s18 = ssub.s32 %s13, 1
      %s19 = ssub.s32 %s13, 2
      %s26 = sadd.s32 1, %s21
      %p27 = scmp.ge.s32.totalorder %s26, 2
      %s28 = scalar_select %p27, 0, %s26
      %s29 = sadd.s32 1, %s20
      %s30 = scalar_select %p27, %s29, %s20
      %p31 = scmp.ge.s32.totalorder %s30, 2
      %s32 = scalar_select %p31, 0, %s30
      %s33 = ssub.s32 %s20, %s32
      %p34 = scmp.eq.s32.totalorder %s33, 0
      %s36 = sadd.s32 %s35, 1
      %s37 = scalar_select %p34, %s35, %s36
      %p40 = pneg %p34
      %p41 = scmp.eq.s32.totalorder %s13, 3
      %p42 = por %p40, %p41
      %p43 = scmp.ne.s32.totalorder %s35, %s38
      %p44 = scmp.eq.s32.totalorder %s13, 0
      %p45 = por %p43, %p44
      %p46 = scmp.ne.s32.totalorder %s35, %s38
      %p47 = scmp.eq.s32.totalorder %s18, 3
      %p48 = por %p46, %p47
      %p49 = scmp.ne.s32.totalorder %s38, %s39
      %p50 = scmp.eq.s32.totalorder %s18, 0
      %p51 = por %p49, %p50
      %p52 = scmp.ne.s32.totalorder %s38, %s39
      %p53 = scmp.eq.s32.totalorder %s19, 3
      %p54 = por %p52, %p53
      %p56 = scmp.ne.s32.totalorder %s39, %s55
      %p57 = scmp.eq.s32.totalorder %s19, 0
      %p58 = por %p56, %p57
      %s59 = ssub.s32 %s21, %s28
      %p60 = scmp.eq.s32.totalorder %s59, 0
      %s62 = sadd.s32 %s61, 1
      %s63 = scalar_select %p60, %s61, %s62
      %p66 = pneg %p60
      %p67 = scmp.eq.s32.totalorder %s13, 3
      %p68 = por %p66, %p67
      %p69 = scmp.ne.s32.totalorder %s61, %s64
      %p70 = scmp.eq.s32.totalorder %s13, 0
      %p71 = por %p69, %p70
      %p72 = scmp.ne.s32.totalorder %s61, %s64
      %p73 = scmp.eq.s32.totalorder %s18, 3
      %p74 = por %p72, %p73
      %p75 = scmp.ne.s32.totalorder %s64, %s65
      %p76 = scmp.eq.s32.totalorder %s18, 0
      %p77 = por %p75, %p76
      %p78 = scmp.ne.s32.totalorder %s64, %s65
      %p79 = scmp.eq.s32.totalorder %s19, 3
      %p80 = por %p78, %p79
      %p82 = scmp.ne.s32.totalorder %s65, %s81
      %p83 = scmp.eq.s32.totalorder %s19, 0
      %p84 = por %p82, %p83
      %s85 = ssub.s32 %s21, %s28
      %p86 = scmp.eq.s32.totalorder %s85, 0
      %s88 = sadd.s32 %s87, 1
      %s89 = scalar_select %p86, %s87, %s88
      %p92 = pneg %p86
      %p93 = scmp.eq.s32.totalorder %s13, 3
      %p94 = por %p92, %p93
      %p95 = scmp.ne.s32.totalorder %s87, %s90
      %p96 = scmp.eq.s32.totalorder %s13, 0
      %p97 = por %p95, %p96
      %p98 = scmp.ne.s32.totalorder %s87, %s90
      %p99 = scmp.eq.s32.totalorder %s18, 3
      %p100 = por %p98, %p99
      %p101 = scmp.ne.s32.totalorder %s90, %s91
      %p102 = scmp.eq.s32.totalorder %s18, 0
      %p103 = por %p101, %p102
      %p104 = scmp.ne.s32.totalorder %s90, %s91
      %p105 = scmp.eq.s32.totalorder %s19, 3
      %p106 = por %p104, %p105
      %p108 = scmp.ne.s32.totalorder %s91, %s107
      %p109 = scmp.eq.s32.totalorder %s19, 0
      %p110 = por %p108, %p109
      %s111 = ssub.s32 %s21, %s28
      %p112 = scmp.eq.s32.totalorder %s111, 0
      %s114 = sadd.s32 %s113, 1
      %s115 = scalar_select %p112, %s113, %s114
      %p118 = pneg %p112
      %p119 = scmp.eq.s32.totalorder %s13, 3
      %p120 = por %p118, %p119
      %p121 = scmp.ne.s32.totalorder %s113, %s116
      %p122 = scmp.eq.s32.totalorder %s13, 0
      %p123 = por %p121, %p122
      %p124 = scmp.ne.s32.totalorder %s113, %s116
      %p125 = scmp.eq.s32.totalorder %s18, 3
      %p126 = por %p124, %p125
      %p127 = scmp.ne.s32.totalorder %s116, %s117
      %p128 = scmp.eq.s32.totalorder %s18, 0
      %p129 = por %p127, %p128
      %p130 = scmp.ne.s32.totalorder %s116, %s117
      %p131 = scmp.eq.s32.totalorder %s19, 3
      %p132 = por %p130, %p131
      %p134 = scmp.ne.s32.totalorder %s117, %s133
      %p135 = scmp.eq.s32.totalorder %s19, 0
      %p136 = por %p134, %p135
      %s138 = sadd.s32 %s137, 1
      %p141 = scmp.eq.s32.totalorder %s13, 3
      %p142 = scmp.ne.s32.totalorder %s137, %s139
      %p143 = scmp.eq.s32.totalorder %s13, 0
      %p144 = por %p142, %p143
      %p145 = scmp.ne.s32.totalorder %s137, %s139
      %p146 = scmp.eq.s32.totalorder %s18, 3
      %p147 = por %p145, %p146
      %p148 = scmp.ne.s32.totalorder %s139, %s140
      %p149 = scmp.eq.s32.totalorder %s18, 0
      %p150 = por %p148, %p149
      %p151 = scmp.ne.s32.totalorder %s139, %s140
      %p152 = scmp.eq.s32.totalorder %s19, 3
      %p153 = por %p151, %p152
      %p155 = scmp.ne.s32.totalorder %s140, %s154
      %p156 = scmp.eq.s32.totalorder %s19, 0
      %p157 = por %p155, %p156
      %s159 = sadd.s32 %s158, 1
      %p162 = scmp.eq.s32.totalorder %s13, 3
      %p163 = scmp.ne.s32.totalorder %s158, %s160
      %p164 = scmp.eq.s32.totalorder %s13, 0
      %p165 = por %p163, %p164
      %p166 = scmp.ne.s32.totalorder %s158, %s160
      %p167 = scmp.eq.s32.totalorder %s18, 3
      %p168 = por %p166, %p167
      %p169 = scmp.ne.s32.totalorder %s160, %s161
      %p170 = scmp.eq.s32.totalorder %s18, 0
      %p171 = por %p169, %p170
      %p172 = scmp.ne.s32.totalorder %s160, %s161
      %p173 = scmp.eq.s32.totalorder %s19, 3
      %p174 = por %p172, %p173
      %p176 = scmp.ne.s32.totalorder %s161, %s175
      %p177 = scmp.eq.s32.totalorder %s19, 0
      %p178 = por %p176, %p177
      %s180 = sadd.s32 %s179, 1
      %p183 = scmp.eq.s32.totalorder %s13, 3
      %p184 = scmp.ne.s32.totalorder %s179, %s181
      %p185 = scmp.eq.s32.totalorder %s13, 0
      %p186 = por %p184, %p185
      %p187 = scmp.ne.s32.totalorder %s179, %s181
      %p188 = scmp.eq.s32.totalorder %s18, 3
      %p189 = por %p187, %p188
      %p190 = scmp.ne.s32.totalorder %s181, %s182
      %p191 = scmp.eq.s32.totalorder %s18, 0
      %p192 = por %p190, %p191
      %p193 = scmp.ne.s32.totalorder %s181, %s182
      %p194 = scmp.eq.s32.totalorder %s19, 3
      %p195 = por %p193, %p194
      %p197 = scmp.ne.s32.totalorder %s182, %s196
      %p198 = scmp.eq.s32.totalorder %s19, 0
      %p199 = por %p197, %p198
      %s200 = ssub.s32 %s20, %s32
      %p201 = scmp.eq.s32.totalorder %s200, 0
      %s203 = sadd.s32 %s202, 1
      %s204 = scalar_select %p201, %s202, %s203
      %p207 = pneg %p201
      %p208 = scmp.eq.s32.totalorder %s13, 3
      %p209 = por %p207, %p208
      %p210 = scmp.ne.s32.totalorder %s202, %s205
      %p211 = scmp.eq.s32.totalorder %s13, 0
      %p212 = por %p210, %p211
      %p213 = scmp.ne.s32.totalorder %s202, %s205
      %p214 = scmp.eq.s32.totalorder %s18, 3
      %p215 = por %p213, %p214
      %p216 = scmp.ne.s32.totalorder %s205, %s206
      %p217 = scmp.eq.s32.totalorder %s18, 0
      %p218 = por %p216, %p217
      %p219 = scmp.ne.s32.totalorder %s205, %s206
      %p220 = scmp.eq.s32.totalorder %s19, 3
      %p221 = por %p219, %p220
      %p223 = scmp.ne.s32.totalorder %s206, %s222
      %p224 = scmp.eq.s32.totalorder %s19, 0
      %p225 = por %p223, %p224
      %p226 = scmp.le.s32.totalorder 1, %s13
      %p227 = scmp.lt.s32.totalorder %s13, 5
      %p228 = pnand %p226, %p227
      %p229 = pneg %p228
      // Predicated region
      $region9: #{deepsynergy_forward.1} parent=5 // pred_check
        _
      $region10: #{deepsynergy_forward.1} parent=5 // pred_check_branch
        %231 = sbr.rel (%p228) target = $region12
      $region11: #{deepsynergy_forward.1} parent=5 // pred_region
        %s232 = ssub.s32 %s13, 1
        // Predicated region
        $region13: #{deepsynergy_forward.1} parent=11 // pred_check
          %p233 = pneg %p150
        $region14: #{deepsynergy_forward.1} parent=11 // pred_check_branch
          %235 = sbr.rel (%p233) target = $region16
        $region15: #{deepsynergy_forward.1} parent=11 // pred_region
          _
        $region16: #{deepsynergy_forward.1} parent=11 // pred_fallthru
          _
        // Predicated region
        $region17: #{deepsynergy_forward.1} parent=11 // pred_check
          %p236 = pneg %p171
        $region18: #{deepsynergy_forward.1} parent=11 // pred_check_branch
          %238 = sbr.rel (%p236) target = $region20
        $region19: #{deepsynergy_forward.1} parent=11 // pred_region
          _
        $region20: #{deepsynergy_forward.1} parent=11 // pred_fallthru
          _
        // Predicated region
        $region21: #{deepsynergy_forward.1} parent=11 // pred_check
          %p239 = pneg %p192
        $region22: #{deepsynergy_forward.1} parent=11 // pred_check_branch
          %241 = sbr.rel (%p239) target = $region24
        $region23: #{deepsynergy_forward.1} parent=11 // pred_region
          _
        $region24: #{deepsynergy_forward.1} parent=11 // pred_fallthru
          _
      $region12: #{deepsynergy_forward.1} parent=5 // pred_fallthru
        _
      %p242 = scmp.lt.s32.totalorder %s13, 4
      // Predicated region
      $region25: #{deepsynergy_forward.1} parent=5 // pred_check
        %p243 = pneg %p242
      $region26: #{deepsynergy_forward.1} parent=5 // pred_check_branch
        %245 = sbr.rel (%p243) target = $region28
      $region27: #{deepsynergy_forward.1} parent=5 // pred_region
        // Predicated region
        $region29: #{deepsynergy_forward.1} parent=27 // pred_check
          %p246 = pneg %p45
        $region30: #{deepsynergy_forward.1} parent=27 // pred_check_branch
          %248 = sbr.rel (%p246) target = $region32
        $region31: #{deepsynergy_forward.1} parent=27 // pred_region
          %p249 = scmp.lt.s32.totalorder %s20, 1
          %s250 = scalar_select %p249, %s20, 1
          %s251 = smul.addr %s250, 2
          %s252 = smul.addr %s251, 8
          %s253 = scalar_lea.vmem %s0, %s252
        $region32: #{deepsynergy_forward.1} parent=27 // pred_fallthru
          _
        // Predicated region
        $region33: #{deepsynergy_forward.1} parent=27 // pred_check
          %p254 = pneg %p71
        $region34: #{deepsynergy_forward.1} parent=27 // pred_check_branch
          %256 = sbr.rel (%p254) target = $region36
        $region35: #{deepsynergy_forward.1} parent=27 // pred_region
          %s257 = sand.u32 %s61, 1
          %s258 = sand.u32 %s61, 1
          %s259 = smul.addr %s258, 512
          %s260 = scalar_lea.vmem [#allocation3], %s259
          %s261 = smul.u32 2, %s21
          %s262 = smul.addr %s261, 8
          %s263 = scalar_lea.vmem %s1, %s262
          // Predicated region
          $region37: #{deepsynergy_forward.1} parent=35 // pred_check
            _
          $region38: #{deepsynergy_forward.1} parent=35 // pred_check_branch
            %265 = sbr.rel (0) target = $region40
          $region39: #{deepsynergy_forward.1} parent=35 // pred_region
            // Predicated region
            $region41: #{deepsynergy_forward.1} parent=39 // pred_check
              _
            $region42: #{deepsynergy_forward.1} parent=39 // pred_check_branch
              %267 = sbr.rel (0) target = $region44
            $region43: #{deepsynergy_forward.1} parent=39 // pred_region
              loop: start=0, step=1, limit=1
              $region45: #{deepsynergy_forward.1} parent=43 // loop_pre_header
                _
              $region46: #{deepsynergy_forward.1} parent=43 // loop_header
                %s269 = sphi 0, %s273
                %p270 = scmp.ge.s32.totalorder %s269, 1
                %s274 = sphi %s263, %s263
                %s275 = sphi %s260, %s260
              $region47: #{deepsynergy_forward.1} parent=43 // loop_header_branch
                %272 = sbr.rel (%p270) target = $region51
              $region48: #{deepsynergy_forward.1} parent=43 // loop_body
                %v276 = vld [vmem:[%s274] sm:$0xff]
                %277 = vst [vmem:[%s275] sm:$0xff] %v276
                %v278 = vld [vmem:[%s274 + $0x8] sm:$0xff]
                %279 = vst [vmem:[%s275 + $0x8] sm:$0xff] %v278
                %v280 = vld [vmem:[%s274 + $0x20] sm:$0xff]
                %281 = vst [vmem:[%s275 + $0x10] sm:$0xff] %v280
                %v282 = vld [vmem:[%s274 + $0x28] sm:$0xff]
                %283 = vst [vmem:[%s275 + $0x18] sm:$0xff] %v282
                %v284 = vld [vmem:[%s274 + $0x40] sm:$0xff]
                %285 = vst [vmem:[%s275 + $0x20] sm:$0xff] %v284
                %v286 = vld [vmem:[%s274 + $0x48] sm:$0xff]
                %287 = vst [vmem:[%s275 + $0x28] sm:$0xff] %v286
                %v288 = vld [vmem:[%s274 + $0x60] sm:$0xff]
                %289 = vst [vmem:[%s275 + $0x30] sm:$0xff] %v288
                %v290 = vld [vmem:[%s274 + $0x68] sm:$0xff]
                %291 = vst [vmem:[%s275 + $0x38] sm:$0xff] %v290
                %v292 = vld [vmem:[%s274 + $0x80] sm:$0xff]
                %293 = vst [vmem:[%s275 + $0x40] sm:$0xff] %v292
                %v294 = vld [vmem:[%s274 + $0x88] sm:$0xff]
                %295 = vst [vmem:[%s275 + $0x48] sm:$0xff] %v294
                %v296 = vld [vmem:[%s274 + $0xa0] sm:$0xff]
                %297 = vst [vmem:[%s275 + $0x50] sm:$0xff] %v296
                %v298 = vld [vmem:[%s274 + $0xa8] sm:$0xff]
                %299 = vst [vmem:[%s275 + $0x58] sm:$0xff] %v298
                %v300 = vld [vmem:[%s274 + $0xc0] sm:$0xff]
                %301 = vst [vmem:[%s275 + $0x60] sm:$0xff] %v300
                %v302 = vld [vmem:[%s274 + $0xc8] sm:$0xff]
                %303 = vst [vmem:[%s275 + $0x68] sm:$0xff] %v302
                %v304 = vld [vmem:[%s274 + $0xe0] sm:$0xff]
                %305 = vst [vmem:[%s275 + $0x70] sm:$0xff] %v304
                %v306 = vld [vmem:[%s274 + $0xe8] sm:$0xff]
                %307 = vst [vmem:[%s275 + $0x78] sm:$0xff] %v306
                %v308 = vld [vmem:[%s274 + $0x100] sm:$0xff]
                %309 = vst [vmem:[%s275 + $0x80] sm:$0xff] %v308
                %v310 = vld [vmem:[%s274 + $0x108] sm:$0xff]
                %311 = vst [vmem:[%s275 + $0x88] sm:$0xff] %v310
                %v312 = vld [vmem:[%s274 + $0x120] sm:$0xff]
                %313 = vst [vmem:[%s275 + $0x90] sm:$0xff] %v312
                %v314 = vld [vmem:[%s274 + $0x128] sm:$0xff]
                %315 = vst [vmem:[%s275 + $0x98] sm:$0xff] %v314
                %v316 = vld [vmem:[%s274 + $0x140] sm:$0xff]
                %317 = vst [vmem:[%s275 + $0xa0] sm:$0xff] %v316
                %v318 = vld [vmem:[%s274 + $0x148] sm:$0xff]
                %319 = vst [vmem:[%s275 + $0xa8] sm:$0xff] %v318
                %v320 = vld [vmem:[%s274 + $0x160] sm:$0xff]
                %321 = vst [vmem:[%s275 + $0xb0] sm:$0xff] %v320
                %v322 = vld [vmem:[%s274 + $0x168] sm:$0xff]
                %323 = vst [vmem:[%s275 + $0xb8] sm:$0xff] %v322
                %v324 = vld [vmem:[%s274 + $0x180] sm:$0xff]
                %325 = vst [vmem:[%s275 + $0xc0] sm:$0xff] %v324
                %v326 = vld [vmem:[%s274 + $0x188] sm:$0xff]
                %327 = vst [vmem:[%s275 + $0xc8] sm:$0xff] %v326
                %v328 = vld [vmem:[%s274 + $0x1a0] sm:$0xff]
                %329 = vst [vmem:[%s275 + $0xd0] sm:$0xff] %v328
                %v330 = vld [vmem:[%s274 + $0x1a8] sm:$0xff]
                %331 = vst [vmem:[%s275 + $0xd8] sm:$0xff] %v330
                %v332 = vld [vmem:[%s274 + $0x1c0] sm:$0xff]
                %333 = vst [vmem:[%s275 + $0xe0] sm:$0xff] %v332
                %v334 = vld [vmem:[%s274 + $0x1c8] sm:$0xff]
                %335 = vst [vmem:[%s275 + $0xe8] sm:$0xff] %v334
                %v336 = vld [vmem:[%s274 + $0x1e0] sm:$0xff]
                %337 = vst [vmem:[%s275 + $0xf0] sm:$0xff] %v336
                %v338 = vld [vmem:[%s274 + $0x1e8] sm:$0xff]
                %339 = vst [vmem:[%s275 + $0xf8] sm:$0xff] %v338
                %v340 = vld [vmem:[%s274 + $0x200] sm:$0xff]
                %341 = vst [vmem:[%s275 + $0x100] sm:$0xff] %v340
                %v342 = vld [vmem:[%s274 + $0x208] sm:$0xff]
                %343 = vst [vmem:[%s275 + $0x108] sm:$0xff] %v342
                %v344 = vld [vmem:[%s274 + $0x220] sm:$0xff]
                %345 = vst [vmem:[%s275 + $0x110] sm:$0xff] %v344
                %v346 = vld [vmem:[%s274 + $0x228] sm:$0xff]
                %347 = vst [vmem:[%s275 + $0x118] sm:$0xff] %v346
                %v348 = vld [vmem:[%s274 + $0x240] sm:$0xff]
                %349 = vst [vmem:[%s275 + $0x120] sm:$0xff] %v348
                %v350 = vld [vmem:[%s274 + $0x248] sm:$0xff]
                %351 = vst [vmem:[%s275 + $0x128] sm:$0xff] %v350
                %v352 = vld [vmem:[%s274 + $0x260] sm:$0xff]
                %353 = vst [vmem:[%s275 + $0x130] sm:$0xff] %v352
                %v354 = vld [vmem:[%s274 + $0x268] sm:$0xff]
                %355 = vst [vmem:[%s275 + $0x138] sm:$0xff] %v354
                %v356 = vld [vmem:[%s274 + $0x280] sm:$0xff]
                %357 = vst [vmem:[%s275 + $0x140] sm:$0xff] %v356
                %v358 = vld [vmem:[%s274 + $0x288] sm:$0xff]
                %359 = vst [vmem:[%s275 + $0x148] sm:$0xff] %v358
                %v360 = vld [vmem:[%s274 + $0x2a0] sm:$0xff]
                %361 = vst [vmem:[%s275 + $0x150] sm:$0xff] %v360
                %v362 = vld [vmem:[%s274 + $0x2a8] sm:$0xff]
                %363 = vst [vmem:[%s275 + $0x158] sm:$0xff] %v362
                %v364 = vld [vmem:[%s274 + $0x2c0] sm:$0xff]
                %365 = vst [vmem:[%s275 + $0x160] sm:$0xff] %v364
                %v366 = vld [vmem:[%s274 + $0x2c8] sm:$0xff]
                %367 = vst [vmem:[%s275 + $0x168] sm:$0xff] %v366
                %v368 = vld [vmem:[%s274 + $0x2e0] sm:$0xff]
                %369 = vst [vmem:[%s275 + $0x170] sm:$0xff] %v368
                %v370 = vld [vmem:[%s274 + $0x2e8] sm:$0xff]
                %371 = vst [vmem:[%s275 + $0x178] sm:$0xff] %v370
                %v372 = vld [vmem:[%s274 + $0x300] sm:$0xff]
                %373 = vst [vmem:[%s275 + $0x180] sm:$0xff] %v372
                %v374 = vld [vmem:[%s274 + $0x308] sm:$0xff]
                %375 = vst [vmem:[%s275 + $0x188] sm:$0xff] %v374
                %v376 = vld [vmem:[%s274 + $0x320] sm:$0xff]
                %377 = vst [vmem:[%s275 + $0x190] sm:$0xff] %v376
                %v378 = vld [vmem:[%s274 + $0x328] sm:$0xff]
                %379 = vst [vmem:[%s275 + $0x198] sm:$0xff] %v378
                %v380 = vld [vmem:[%s274 + $0x340] sm:$0xff]
                %381 = vst [vmem:[%s275 + $0x1a0] sm:$0xff] %v380
                %v382 = vld [vmem:[%s274 + $0x348] sm:$0xff]
                %383 = vst [vmem:[%s275 + $0x1a8] sm:$0xff] %v382
                %v384 = vld [vmem:[%s274 + $0x360] sm:$0xff]
                %385 = vst [vmem:[%s275 + $0x1b0] sm:$0xff] %v384
                %v386 = vld [vmem:[%s274 + $0x368] sm:$0xff]
                %387 = vst [vmem:[%s275 + $0x1b8] sm:$0xff] %v386
                %v388 = vld [vmem:[%s274 + $0x380] sm:$0xff]
                %389 = vst [vmem:[%s275 + $0x1c0] sm:$0xff] %v388
                %v390 = vld [vmem:[%s274 + $0x388] sm:$0xff]
                %391 = vst [vmem:[%s275 + $0x1c8] sm:$0xff] %v390
                %v392 = vld [vmem:[%s274 + $0x3a0] sm:$0xff]
                %393 = vst [vmem:[%s275 + $0x1d0] sm:$0xff] %v392
                %v394 = vld [vmem:[%s274 + $0x3a8] sm:$0xff]
                %395 = vst [vmem:[%s275 + $0x1d8] sm:$0xff] %v394
                %v396 = vld [vmem:[%s274 + $0x3c0] sm:$0xff]
                %397 = vst [vmem:[%s275 + $0x1e0] sm:$0xff] %v396
                %v398 = vld [vmem:[%s274 + $0x3c8] sm:$0xff]
                %399 = vst [vmem:[%s275 + $0x1e8] sm:$0xff] %v398
                %v400 = vld [vmem:[%s274 + $0x3e0] sm:$0xff]
                %401 = vst [vmem:[%s275 + $0x1f0] sm:$0xff] %v400
                %v402 = vld [vmem:[%s274 + $0x3e8] sm:$0xff]
                %403 = vst [vmem:[%s275 + $0x1f8] sm:$0xff] %v402
              $region49: #{deepsynergy_forward.1} parent=43 // loop_footer
                %s273 = sadd.s32 1, %s269
              $region50: #{deepsynergy_forward.1} parent=43 // loop_footer_branch
                %268 = sbr.rel target = $region46
              $region51: #{deepsynergy_forward.1} parent=43 // loop_exit
                _
            $region44: #{deepsynergy_forward.1} parent=39 // pred_fallthru
              _
            // Predicated region
            $region52: #{deepsynergy_forward.1} parent=39 // pred_check
              _
            $region53: #{deepsynergy_forward.1} parent=39 // pred_check_branch
              %405 = sbr.rel target = $region55
            $region54: #{deepsynergy_forward.1} parent=39 // pred_region
              _
            $region55: #{deepsynergy_forward.1} parent=39 // pred_fallthru
              _
          $region40: #{deepsynergy_forward.1} parent=35 // pred_fallthru
            _
          %406 = vnop
        $region36: #{deepsynergy_forward.1} parent=27 // pred_fallthru
          _
        // Predicated region
        $region56: #{deepsynergy_forward.1} parent=27 // pred_check
          %p407 = pneg %p97
        $region57: #{deepsynergy_forward.1} parent=27 // pred_check_branch
          %409 = sbr.rel (%p407) target = $region59
        $region58: #{deepsynergy_forward.1} parent=27 // pred_region
          %s410 = smul.u32 2, %s21
          %p411 = scmp.lt.s32.totalorder %s410, 3
          %s412 = scalar_select %p411, %s410, 3
          %s413 = scalar_lea.vmem %s2, %s412
          %s414 = smul.u32 2, %s21
        $region59: #{deepsynergy_forward.1} parent=27 // pred_fallthru
          _
        // Predicated region
        $region60: #{deepsynergy_forward.1} parent=27 // pred_check
          %p415 = pneg %p123
        $region61: #{deepsynergy_forward.1} parent=27 // pred_check_branch
          %417 = sbr.rel (%p415) target = $region63
        $region62: #{deepsynergy_forward.1} parent=27 // pred_region
          %s418 = smul.u32 32, %s21
          %p419 = scmp.lt.s32.totalorder %s418, 63
          %s420 = scalar_select %p419, %s418, 63
          %s421 = smul.addr %s420, 2
          %s422 = smul.addr %s421, 8
          %s423 = scalar_lea.vmem %s3, %s422
          %s424 = smul.u32 32, %s21
        $region63: #{deepsynergy_forward.1} parent=27 // pred_fallthru
          _
      $region28: #{deepsynergy_forward.1} parent=5 // pred_fallthru
        _
      %p425 = scmp.le.s32.totalorder 1, %s13
      %p426 = scmp.lt.s32.totalorder %s13, 5
      %p427 = pnand %p425, %p426
      %p428 = pneg %p427
      // Predicated region
      $region64: #{deepsynergy_forward.1} parent=5 // pred_check
        _
      $region65: #{deepsynergy_forward.1} parent=5 // pred_check_branch
        %430 = sbr.rel (%p427) target = $region67
      $region66: #{deepsynergy_forward.1} parent=5 // pred_region
        %s431 = ssub.s32 %s13, 1
        %s432 = sand.u32 %s64, 1
        %s433 = sand.u32 %s64, 1
        %s434 = smul.addr %s433, 512
        %s435 = scalar_lea.vmem [#allocation3], %s434
        // Predicated region
        $region68: #{deepsynergy_forward.1} parent=66 // pred_check
          %p436 = pneg %p77
        $region69: #{deepsynergy_forward.1} parent=66 // pred_check_branch
          %438 = sbr.rel (%p436) target = $region71
        $region70: #{deepsynergy_forward.1} parent=66 // pred_region
          _
        $region71: #{deepsynergy_forward.1} parent=66 // pred_fallthru
          _
        %p439 = scmp.lt.s32.totalorder %s22, 1
        %s440 = scalar_select %p439, %s22, 1
        %s441 = smul.addr %s440, 2
        %s442 = smul.addr %s441, 8
        %s443 = scalar_lea.vmem %s0, %s442
        %p444 = pneg %p51
        %p445 = pneg %p48
        %s446 = sand.u32 %s64, 1
        %s447 = sand.u32 %s64, 1
        %s448 = smul.addr %s447, 512
        %s449 = scalar_lea.vmem [#allocation3], %s448
        %p450 = pneg %p77
        %p451 = pneg %p74
        %s452 = smul.u32 2, %s23
        %p453 = scmp.lt.s32.totalorder %s452, 3
        %s454 = scalar_select %p453, %s452, 3
        %s455 = scalar_lea.vmem %s2, %s454
        %p456 = pneg %p103
        %p457 = pneg %p100
        %s458 = smul.u32 32, %s23
        %p459 = scmp.lt.s32.totalorder %s458, 63
        %s460 = scalar_select %p459, %s458, 63
        %s461 = smul.addr %s460, 2
        %s462 = smul.addr %s461, 8
        %s463 = scalar_lea.vmem %s3, %s462
        %p464 = pneg %p129
        %p465 = pneg %p126
        %p466 = pneg %p150
        %p467 = pneg %p147
        %p468 = pneg %p171
        %p469 = pneg %p168
        %p470 = pneg %p192
        %p471 = pneg %p189
        %p472 = pneg %p218
        %p473 = pneg %p215
        %p474 = scmp.lt.s32.totalorder %s22, 1
        %s475 = scalar_select %p474, %s22, 1
        %s476 = smul.addr %s475, 8
        %s477 = scalar_lea.vmem %s7, %s476
        %p478 = scmp.lt.s32.totalorder %s22, 1
        %s479 = scalar_select %p478, %s22, 1
        %s480 = smul.addr %s479, 2
        %s481 = smul.addr %s480, 8
        %s482 = scalar_lea.vmem %s0, %s481
        %s483 = smul.u32 2, %s23
        %s484 = smul.u32 2, %s23
        %p485 = scmp.lt.s32.totalorder %s484, 3
        %s486 = scalar_select %p485, %s484, 3
        %s487 = scalar_lea.vmem %s2, %s486
        %s488 = smul.u32 2, %s23
        %s489 = smul.u32 32, %s23
        %p490 = scmp.lt.s32.totalorder %s489, 63
        %s491 = scalar_select %p490, %s489, 63
        %s492 = smul.addr %s491, 2
        %s493 = smul.addr %s492, 8
        %s494 = scalar_lea.vmem %s3, %s493
        %s495 = smul.u32 32, %s23
        %p496 = scmp.lt.s32.totalorder %s22, 1
        %s497 = scalar_select %p496, %s22, 1
        %s498 = smul.addr %s497, 8
        %s499 = scalar_lea.vmem %s7, %s498
        %p500 = scmp.eq.s32.totalorder %s23, 0
        // Predicated region
        $region72: #{deepsynergy_forward.1} parent=66 // pred_check
          %p501 = pneg %p500
        $region73: #{deepsynergy_forward.1} parent=66 // pred_check_branch
          %503 = sbr.rel (%p501) target = $region75
        $region74: #{deepsynergy_forward.1} parent=66 // pred_region
          %504 = vst [vmem:[#allocation2] sm:$0xff] 0.0
          %505 = vst [vmem:[#allocation2 + $0x8] sm:$0xff] 0.0
        $region75: #{deepsynergy_forward.1} parent=66 // pred_fallthru
          _
        %v506 = vld [vmem:[%s482] sm:$0xff]
        %v507 = vld [vmem:[%s482 + $0x8] sm:$0xff]
        %v508 = vld [vmem:[%s435] sm:$0xff]
        %v509 = vld [vmem:[%s435 + $0x8] sm:$0xff]
        %v510 = vld [vmem:[%s435 + $0x10] sm:$0xff]
        %v511 = vld [vmem:[%s435 + $0x18] sm:$0xff]
        %v512 = vld [vmem:[%s435 + $0x20] sm:$0xff]
        %v513 = vld [vmem:[%s435 + $0x28] sm:$0xff]
        %v514 = vld [vmem:[%s435 + $0x30] sm:$0xff]
        %v515 = vld [vmem:[%s435 + $0x38] sm:$0xff]
        %v516 = vld [vmem:[%s435 + $0x40] sm:$0xff]
        %v517 = vld [vmem:[%s435 + $0x48] sm:$0xff]
        %v518 = vld [vmem:[%s435 + $0x50] sm:$0xff]
        %v519 = vld [vmem:[%s435 + $0x58] sm:$0xff]
        %v520 = vld [vmem:[%s435 + $0x60] sm:$0xff]
        %v521 = vld [vmem:[%s435 + $0x68] sm:$0xff]
        %v522 = vld [vmem:[%s435 + $0x70] sm:$0xff]
        %v523 = vld [vmem:[%s435 + $0x78] sm:$0xff]
        %v524 = vld [vmem:[%s435 + $0x80] sm:$0xff]
        %v525 = vld [vmem:[%s435 + $0x88] sm:$0xff]
        %v526 = vld [vmem:[%s435 + $0x90] sm:$0xff]
        %v527 = vld [vmem:[%s435 + $0x98] sm:$0xff]
        %v528 = vld [vmem:[%s435 + $0xa0] sm:$0xff]
        %v529 = vld [vmem:[%s435 + $0xa8] sm:$0xff]
        %v530 = vld [vmem:[%s435 + $0xb0] sm:$0xff]
        %v531 = vld [vmem:[%s435 + $0xb8] sm:$0xff]
        %v532 = vld [vmem:[%s435 + $0xc0] sm:$0xff]
        %v533 = vld [vmem:[%s435 + $0xc8] sm:$0xff]
        %v534 = vld [vmem:[%s435 + $0xd0] sm:$0xff]
        %v535 = vld [vmem:[%s435 + $0xd8] sm:$0xff]
        %v536 = vld [vmem:[%s435 + $0xe0] sm:$0xff]
        %v537 = vld [vmem:[%s435 + $0xe8] sm:$0xff]
        %v538 = vld [vmem:[%s435 + $0xf0] sm:$0xff]
        %v539 = vld [vmem:[%s435 + $0xf8] sm:$0xff]
        %v540 = vld [vmem:[%s435 + $0x100] sm:$0xff]
        %v541 = vld [vmem:[%s435 + $0x108] sm:$0xff]
        %v542 = vld [vmem:[%s435 + $0x110] sm:$0xff]
        %v543 = vld [vmem:[%s435 + $0x118] sm:$0xff]
        %v544 = vld [vmem:[%s435 + $0x120] sm:$0xff]
        %v545 = vld [vmem:[%s435 + $0x128] sm:$0xff]
        %v546 = vld [vmem:[%s435 + $0x130] sm:$0xff]
        %v547 = vld [vmem:[%s435 + $0x138] sm:$0xff]
        %v548 = vld [vmem:[%s435 + $0x140] sm:$0xff]
        %v549 = vld [vmem:[%s435 + $0x148] sm:$0xff]
        %v550 = vld [vmem:[%s435 + $0x150] sm:$0xff]
        %v551 = vld [vmem:[%s435 + $0x158] sm:$0xff]
        %v552 = vld [vmem:[%s435 + $0x160] sm:$0xff]
        %v553 = vld [vmem:[%s435 + $0x168] sm:$0xff]
        %v554 = vld [vmem:[%s435 + $0x170] sm:$0xff]
        %v555 = vld [vmem:[%s435 + $0x178] sm:$0xff]
        %v556 = vld [vmem:[%s435 + $0x180] sm:$0xff]
        %v557 = vld [vmem:[%s435 + $0x188] sm:$0xff]
        %v558 = vld [vmem:[%s435 + $0x190] sm:$0xff]
        %v559 = vld [vmem:[%s435 + $0x198] sm:$0xff]
        %v560 = vld [vmem:[%s435 + $0x1a0] sm:$0xff]
        %v561 = vld [vmem:[%s435 + $0x1a8] sm:$0xff]
        %v562 = vld [vmem:[%s435 + $0x1b0] sm:$0xff]
        %v563 = vld [vmem:[%s435 + $0x1b8] sm:$0xff]
        %v564 = vld [vmem:[%s435 + $0x1c0] sm:$0xff]
        %v565 = vld [vmem:[%s435 + $0x1c8] sm:$0xff]
        %v566 = vld [vmem:[%s435 + $0x1d0] sm:$0xff]
        %v567 = vld [vmem:[%s435 + $0x1d8] sm:$0xff]
        %v568 = vld [vmem:[%s435 + $0x1e0] sm:$0xff]
        %v569 = vld [vmem:[%s435 + $0x1e8] sm:$0xff]
        %v570 = vld [vmem:[%s435 + $0x1f0] sm:$0xff]
        %v571 = vld [vmem:[%s435 + $0x1f8] sm:$0xff]
        %v572 = vld [vmem:[%s487] sm:$0x3]
        %v574 = vlaneseq
        %v575 = vshrl.u32 %v574, 7
        %v576 = vsub.s32 0, %v575
        %v577 = vrot.slane %v572, %v576
        %v578 = vlaneseq
        %v579 = vshrl.u32 %v578, 7
        %v580 = vsub.s32 1, %v579
        %v581 = vrot.slane %v572, %v580
        %584 = vmatprep.subr.mxu0 %v539
        %585 = vmatpush1.msra.mxu0 %v538
        %586 = vmatprep.subr.mxu0 %v537
        %587 = vmatpush1.msra.mxu0 %v536
        %588 = vmatprep.subr.mxu0 %v535
        %589 = vmatpush1.msra.mxu0 %v534
        %590 = vmatprep.subr.mxu0 %v533
        %591 = vmatpush1.msra.mxu0 %v532
        %592 = vmatprep.subr.mxu0 %v531
        %593 = vmatpush1.msra.mxu0 %v530
        %594 = vmatprep.subr.mxu0 %v529
        %595 = vmatpush1.msra.mxu0 %v528
        %596 = vmatprep.subr.mxu0 %v527
        %597 = vmatpush1.msra.mxu0 %v526
        %598 = vmatprep.subr.mxu0 %v525
        %599 = vmatpush1.msra.mxu0 %v524
        %600 = vmatprep.subr.mxu0 %v523
        %601 = vmatpush1.msra.mxu0 %v522
        %602 = vmatprep.subr.mxu0 %v521
        %603 = vmatpush1.msra.mxu0 %v520
        %604 = vmatprep.subr.mxu0 %v519
        %605 = vmatpush1.msra.mxu0 %v518
        %606 = vmatprep.subr.mxu0 %v517
        %607 = vmatpush1.msra.mxu0 %v516
        %608 = vmatprep.subr.mxu0 %v515
        %609 = vmatpush1.msra.mxu0 %v514
        %610 = vmatprep.subr.mxu0 %v513
        %611 = vmatpush1.msra.mxu0 %v512
        %612 = vmatprep.subr.mxu0 %v511
        %613 = vmatpush1.msra.mxu0 %v510
        %614 = vmatprep.subr.mxu0 %v509
        %615 = vmatpush1.msra.mxu0 %v508
        %616 = vmatprep.subr.mxu0 %v571
        %617 = vmatpush2.msra.mxu0 %v570
        %618 = vmatprep.subr.mxu0 %v569
        %619 = vmatpush2.msra.mxu0 %v568
        %620 = vmatprep.subr.mxu0 %v567
        %621 = vmatpush2.msra.mxu0 %v566
        %622 = vmatprep.subr.mxu0 %v565
        %623 = vmatpush2.msra.mxu0 %v564
        %624 = vmatprep.subr.mxu0 %v563
        %625 = vmatpush2.msra.mxu0 %v562
        %626 = vmatprep.subr.mxu0 %v561
        %627 = vmatpush2.msra.mxu0 %v560
        %628 = vmatprep.subr.mxu0 %v559
        %629 = vmatpush2.msra.mxu0 %v558
        %630 = vmatprep.subr.mxu0 %v557
        %631 = vmatpush2.msra.mxu0 %v556
        %632 = vmatprep.subr.mxu0 %v555
        %633 = vmatpush2.msra.mxu0 %v554
        %634 = vmatprep.subr.mxu0 %v553
        %635 = vmatpush2.msra.mxu0 %v552
        %636 = vmatprep.subr.mxu0 %v551
        %637 = vmatpush2.msra.mxu0 %v550
        %638 = vmatprep.subr.mxu0 %v549
        %639 = vmatpush2.msra.mxu0 %v548
        %640 = vmatprep.subr.mxu0 %v547
        %641 = vmatpush2.msra.mxu0 %v546
        %642 = vmatprep.subr.mxu0 %v545
        %643 = vmatpush2.msra.mxu0 %v544
        %644 = vmatprep.subr.mxu0 %v543
        %645 = vmatpush2.msra.mxu0 %v542
        %646 = vmatprep.subr.mxu0 %v541
        %647 = vmatpush2.msra.mxu0 %v540
        %648 = vmatprep.mubr.f32.mxu0 %v507
        %649 = vmatmul.mubr.f32.gmra.mxu0 %v506
        %v650 = vpop.f32.mrf.mxu0
        %v651 = vadd.f32 %v577, %v650
        %v652 = vpop.f32.mrf.mxu0
        %v653 = vadd.f32 %v581, %v652
        %654 = vdwg.mxu0
        %v655 = vmax.f32 %v651, 0.0
        %v656 = vmax.f32 %v653, 0.0
        %v657 = vld [vmem:[#allocation2] sm:$0xff]
        %v658 = vld [vmem:[#allocation2 + $0x8] sm:$0xff]
        %v659 = vld [vmem:[%s494] sm:$0xff]
        %v660 = vld [vmem:[%s494 + $0x8] sm:$0xff]
        %v661 = vld [vmem:[%s494 + $0x10] sm:$0xff]
        %v662 = vld [vmem:[%s494 + $0x18] sm:$0xff]
        %v663 = vld [vmem:[%s494 + $0x20] sm:$0xff]
        %v664 = vld [vmem:[%s494 + $0x28] sm:$0xff]
        %v665 = vld [vmem:[%s494 + $0x30] sm:$0xff]
        %v666 = vld [vmem:[%s494 + $0x38] sm:$0xff]
        %v667 = vld [vmem:[%s494 + $0x40] sm:$0xff]
        %v668 = vld [vmem:[%s494 + $0x48] sm:$0xff]
        %v669 = vld [vmem:[%s494 + $0x50] sm:$0xff]
        %v670 = vld [vmem:[%s494 + $0x58] sm:$0xff]
        %v671 = vld [vmem:[%s494 + $0x60] sm:$0xff]
        %v672 = vld [vmem:[%s494 + $0x68] sm:$0xff]
        %v673 = vld [vmem:[%s494 + $0x70] sm:$0xff]
        %v674 = vld [vmem:[%s494 + $0x78] sm:$0xff]
        %v675 = vld [vmem:[%s494 + $0x80] sm:$0xff]
        %v676 = vld [vmem:[%s494 + $0x88] sm:$0xff]
        %v677 = vld [vmem:[%s494 + $0x90] sm:$0xff]
        %v678 = vld [vmem:[%s494 + $0x98] sm:$0xff]
        %v679 = vld [vmem:[%s494 + $0xa0] sm:$0xff]
        %v680 = vld [vmem:[%s494 + $0xa8] sm:$0xff]
        %v681 = vld [vmem:[%s494 + $0xb0] sm:$0xff]
        %v682 = vld [vmem:[%s494 + $0xb8] sm:$0xff]
        %v683 = vld [vmem:[%s494 + $0xc0] sm:$0xff]
        %v684 = vld [vmem:[%s494 + $0xc8] sm:$0xff]
        %v685 = vld [vmem:[%s494 + $0xd0] sm:$0xff]
        %v686 = vld [vmem:[%s494 + $0xd8] sm:$0xff]
        %v687 = vld [vmem:[%s494 + $0xe0] sm:$0xff]
        %v688 = vld [vmem:[%s494 + $0xe8] sm:$0xff]
        %v689 = vld [vmem:[%s494 + $0xf0] sm:$0xff]
        %v690 = vld [vmem:[%s494 + $0xf8] sm:$0xff]
        %v691 = vld [vmem:[%s494 + $0x100] sm:$0xff]
        %v692 = vld [vmem:[%s494 + $0x108] sm:$0xff]
        %v693 = vld [vmem:[%s494 + $0x110] sm:$0xff]
        %v694 = vld [vmem:[%s494 + $0x118] sm:$0xff]
        %v695 = vld [vmem:[%s494 + $0x120] sm:$0xff]
        %v696 = vld [vmem:[%s494 + $0x128] sm:$0xff]
        %v697 = vld [vmem:[%s494 + $0x130] sm:$0xff]
        %v698 = vld [vmem:[%s494 + $0x138] sm:$0xff]
        %v699 = vld [vmem:[%s494 + $0x140] sm:$0xff]
        %v700 = vld [vmem:[%s494 + $0x148] sm:$0xff]
        %v701 = vld [vmem:[%s494 + $0x150] sm:$0xff]
        %v702 = vld [vmem:[%s494 + $0x158] sm:$0xff]
        %v703 = vld [vmem:[%s494 + $0x160] sm:$0xff]
        %v704 = vld [vmem:[%s494 + $0x168] sm:$0xff]
        %v705 = vld [vmem:[%s494 + $0x170] sm:$0xff]
        %v706 = vld [vmem:[%s494 + $0x178] sm:$0xff]
        %v707 = vld [vmem:[%s494 + $0x180] sm:$0xff]
        %v708 = vld [vmem:[%s494 + $0x188] sm:$0xff]
        %v709 = vld [vmem:[%s494 + $0x190] sm:$0xff]
        %v710 = vld [vmem:[%s494 + $0x198] sm:$0xff]
        %v711 = vld [vmem:[%s494 + $0x1a0] sm:$0xff]
        %v712 = vld [vmem:[%s494 + $0x1a8] sm:$0xff]
        %v713 = vld [vmem:[%s494 + $0x1b0] sm:$0xff]
        %v714 = vld [vmem:[%s494 + $0x1b8] sm:$0xff]
        %v715 = vld [vmem:[%s494 + $0x1c0] sm:$0xff]
        %v716 = vld [vmem:[%s494 + $0x1c8] sm:$0xff]
        %v717 = vld [vmem:[%s494 + $0x1d0] sm:$0xff]
        %v718 = vld [vmem:[%s494 + $0x1d8] sm:$0xff]
        %v719 = vld [vmem:[%s494 + $0x1e0] sm:$0xff]
        %v720 = vld [vmem:[%s494 + $0x1e8] sm:$0xff]
        %v721 = vld [vmem:[%s494 + $0x1f0] sm:$0xff]
        %v722 = vld [vmem:[%s494 + $0x1f8] sm:$0xff]
        %723 = vmatprep.subr.mxu0 %v690
        %724 = vmatpush1.msra.mxu0 %v689
        %725 = vmatprep.subr.mxu0 %v688
        %726 = vmatpush1.msra.mxu0 %v687
        %727 = vmatprep.subr.mxu0 %v686
        %728 = vmatpush1.msra.mxu0 %v685
        %729 = vmatprep.subr.mxu0 %v684
        %730 = vmatpush1.msra.mxu0 %v683
        %731 = vmatprep.subr.mxu0 %v682
        %732 = vmatpush1.msra.mxu0 %v681
        %733 = vmatprep.subr.mxu0 %v680
        %734 = vmatpush1.msra.mxu0 %v679
        %735 = vmatprep.subr.mxu0 %v678
        %736 = vmatpush1.msra.mxu0 %v677
        %737 = vmatprep.subr.mxu0 %v676
        %738 = vmatpush1.msra.mxu0 %v675
        %739 = vmatprep.subr.mxu0 %v674
        %740 = vmatpush1.msra.mxu0 %v673
        %741 = vmatprep.subr.mxu0 %v672
        %742 = vmatpush1.msra.mxu0 %v671
        %743 = vmatprep.subr.mxu0 %v670
        %744 = vmatpush1.msra.mxu0 %v669
        %745 = vmatprep.subr.mxu0 %v668
        %746 = vmatpush1.msra.mxu0 %v667
        %747 = vmatprep.subr.mxu0 %v666
        %748 = vmatpush1.msra.mxu0 %v665
        %749 = vmatprep.subr.mxu0 %v664
        %750 = vmatpush1.msra.mxu0 %v663
        %751 = vmatprep.subr.mxu0 %v662
        %752 = vmatpush1.msra.mxu0 %v661
        %753 = vmatprep.subr.mxu0 %v660
        %754 = vmatpush1.msra.mxu0 %v659
        %755 = vmatprep.subr.mxu0 %v722
        %756 = vmatpush2.msra.mxu0 %v721
        %757 = vmatprep.subr.mxu0 %v720
        %758 = vmatpush2.msra.mxu0 %v719
        %759 = vmatprep.subr.mxu0 %v718
        %760 = vmatpush2.msra.mxu0 %v717
        %761 = vmatprep.subr.mxu0 %v716
        %762 = vmatpush2.msra.mxu0 %v715
        %763 = vmatprep.subr.mxu0 %v714
        %764 = vmatpush2.msra.mxu0 %v713
        %765 = vmatprep.subr.mxu0 %v712
        %766 = vmatpush2.msra.mxu0 %v711
        %767 = vmatprep.subr.mxu0 %v710
        %768 = vmatpush2.msra.mxu0 %v709
        %769 = vmatprep.subr.mxu0 %v708
        %770 = vmatpush2.msra.mxu0 %v707
        %771 = vmatprep.subr.mxu0 %v706
        %772 = vmatpush2.msra.mxu0 %v705
        %773 = vmatprep.subr.mxu0 %v704
        %774 = vmatpush2.msra.mxu0 %v703
        %775 = vmatprep.subr.mxu0 %v702
        %776 = vmatpush2.msra.mxu0 %v701
        %777 = vmatprep.subr.mxu0 %v700
        %778 = vmatpush2.msra.mxu0 %v699
        %779 = vmatprep.subr.mxu0 %v698
        %780 = vmatpush2.msra.mxu0 %v697
        %781 = vmatprep.subr.mxu0 %v696
        %782 = vmatpush2.msra.mxu0 %v695
        %783 = vmatprep.subr.mxu0 %v694
        %784 = vmatpush2.msra.mxu0 %v693
        %785 = vmatprep.subr.mxu0 %v692
        %786 = vmatpush2.msra.mxu0 %v691
        %787 = vmatprep.mubr.f32.mxu0 %v656
        %788 = vmatmul.mubr.f32.gmra.mxu0 %v655
        %v789 = vpop.f32.mrf.mxu0
        %v790 = vadd.f32 0.0, %v789
        %v791 = vpop.f32.mrf.mxu0
        %v792 = vadd.f32 0.0, %v791
        %793 = vdwg.mxu0
        %v794 = vadd.f32 %v657, %v790
        %v795 = vadd.f32 %v658, %v792
        %796 = vst [vmem:[#allocation2] sm:$0xff] %v794
        %797 = vst [vmem:[#allocation2 + $0x8] sm:$0xff] %v795
        %p798 = scmp.eq.s32.totalorder %s23, 1
        // Predicated region
        $region76: #{deepsynergy_forward.1} parent=66 // pred_check
          %p799 = pneg %p798
        $region77: #{deepsynergy_forward.1} parent=66 // pred_check_branch
          %801 = sbr.rel (%p799) target = $region79
        $region78: #{deepsynergy_forward.1} parent=66 // pred_region
          %v802 = vld [vmem:[#allocation2] sm:$0xff]
          %v803 = vld [vmem:[#allocation2 + $0x8] sm:$0xff]
          %v804 = vld [vmem:[%s4] sm:$0x3]
          %v806 = vlaneseq
          %v807 = vshrl.u32 %v806, 7
          %v808 = vsub.s32 0, %v807
          %v809 = vrot.slane %v804, %v808
          %v810 = vlaneseq
          %v811 = vshrl.u32 %v810, 7
          %v812 = vsub.s32 1, %v811
          %v813 = vrot.slane %v804, %v812
          %v816 = vadd.f32 %v802, %v809
          %v817 = vadd.f32 %v803, %v813
          %v818 = vmax.f32 %v816, 0.0
          %v819 = vmax.f32 %v817, 0.0
          %v820 = vld [vmem:[%s5] sm:$0xff]
          %v821 = vld [vmem:[%s5 + $0x8] sm:$0xff]
          %v822 = vld [vmem:[%s5 + $0x10] sm:$0xff]
          %v823 = vld [vmem:[%s5 + $0x18] sm:$0xff]
          %v824 = vld [vmem:[%s5 + $0x20] sm:$0xff]
          %v825 = vld [vmem:[%s5 + $0x28] sm:$0xff]
          %v826 = vld [vmem:[%s5 + $0x30] sm:$0xff]
          %v827 = vld [vmem:[%s5 + $0x38] sm:$0xff]
          %v828 = vld [vmem:[%s5 + $0x40] sm:$0xff]
          %v829 = vld [vmem:[%s5 + $0x48] sm:$0xff]
          %v830 = vld [vmem:[%s5 + $0x50] sm:$0xff]
          %v831 = vld [vmem:[%s5 + $0x58] sm:$0xff]
          %v832 = vld [vmem:[%s5 + $0x60] sm:$0xff]
          %v833 = vld [vmem:[%s5 + $0x68] sm:$0xff]
          %v834 = vld [vmem:[%s5 + $0x70] sm:$0xff]
          %v835 = vld [vmem:[%s5 + $0x78] sm:$0xff]
          %v836 = vld [vmem:[%s5 + $0x80] sm:$0xff]
          %v837 = vld [vmem:[%s5 + $0x88] sm:$0xff]
          %v838 = vld [vmem:[%s5 + $0x90] sm:$0xff]
          %v839 = vld [vmem:[%s5 + $0x98] sm:$0xff]
          %v840 = vld [vmem:[%s5 + $0xa0] sm:$0xff]
          %v841 = vld [vmem:[%s5 + $0xa8] sm:$0xff]
          %v842 = vld [vmem:[%s5 + $0xb0] sm:$0xff]
          %v843 = vld [vmem:[%s5 + $0xb8] sm:$0xff]
          %v844 = vld [vmem:[%s5 + $0xc0] sm:$0xff]
          %v845 = vld [vmem:[%s5 + $0xc8] sm:$0xff]
          %v846 = vld [vmem:[%s5 + $0xd0] sm:$0xff]
          %v847 = vld [vmem:[%s5 + $0xd8] sm:$0xff]
          %v848 = vld [vmem:[%s5 + $0xe0] sm:$0xff]
          %v849 = vld [vmem:[%s5 + $0xe8] sm:$0xff]
          %v850 = vld [vmem:[%s5 + $0xf0] sm:$0xff]
          %v851 = vld [vmem:[%s5 + $0xf8] sm:$0xff]
          %v852 = vld [vmem:[%s6] sm:$0x1]
          %v854 = vlaneseq
          %v855 = vshrl.u32 %v854, 7
          %v856 = vsub.s32 0, %v855
          %v857 = vrot.slane %v852, %v856
          %859 = vmatprep.subr.mxu0 0.0
          %860 = vmatpush1.msra.mxu0 %v835
          %861 = vmatprep.subr.mxu0 0.0
          %862 = vmatpush1.msra.mxu0 %v834
          %863 = vmatprep.subr.mxu0 0.0
          %864 = vmatpush1.msra.mxu0 %v833
          %865 = vmatprep.subr.mxu0 0.0
          %866 = vmatpush1.msra.mxu0 %v832
          %867 = vmatprep.subr.mxu0 0.0
          %868 = vmatpush1.msra.mxu0 %v831
          %869 = vmatprep.subr.mxu0 0.0
          %870 = vmatpush1.msra.mxu0 %v830
          %871 = vmatprep.subr.mxu0 0.0
          %872 = vmatpush1.msra.mxu0 %v829
          %873 = vmatprep.subr.mxu0 0.0
          %874 = vmatpush1.msra.mxu0 %v828
          %875 = vmatprep.subr.mxu0 0.0
          %876 = vmatpush1.msra.mxu0 %v827
          %877 = vmatprep.subr.mxu0 0.0
          %878 = vmatpush1.msra.mxu0 %v826
          %879 = vmatprep.subr.mxu0 0.0
          %880 = vmatpush1.msra.mxu0 %v825
          %881 = vmatprep.subr.mxu0 0.0
          %882 = vmatpush1.msra.mxu0 %v824
          %883 = vmatprep.subr.mxu0 0.0
          %884 = vmatpush1.msra.mxu0 %v823
          %885 = vmatprep.subr.mxu0 0.0
          %886 = vmatpush1.msra.mxu0 %v822
          %887 = vmatprep.subr.mxu0 0.0
          %888 = vmatpush1.msra.mxu0 %v821
          %889 = vmatprep.subr.mxu0 0.0
          %890 = vmatpush1.msra.mxu0 %v820
          %891 = vmatprep.subr.mxu0 0.0
          %892 = vmatpush2.msra.mxu0 %v851
          %893 = vmatprep.subr.mxu0 0.0
          %894 = vmatpush2.msra.mxu0 %v850
          %895 = vmatprep.subr.mxu0 0.0
          %896 = vmatpush2.msra.mxu0 %v849
          %897 = vmatprep.subr.mxu0 0.0
          %898 = vmatpush2.msra.mxu0 %v848
          %899 = vmatprep.subr.mxu0 0.0
          %900 = vmatpush2.msra.mxu0 %v847
          %901 = vmatprep.subr.mxu0 0.0
          %902 = vmatpush2.msra.mxu0 %v846
          %903 = vmatprep.subr.mxu0 0.0
          %904 = vmatpush2.msra.mxu0 %v845
          %905 = vmatprep.subr.mxu0 0.0
          %906 = vmatpush2.msra.mxu0 %v844
          %907 = vmatprep.subr.mxu0 0.0
          %908 = vmatpush2.msra.mxu0 %v843
          %909 = vmatprep.subr.mxu0 0.0
          %910 = vmatpush2.msra.mxu0 %v842
          %911 = vmatprep.subr.mxu0 0.0
          %912 = vmatpush2.msra.mxu0 %v841
          %913 = vmatprep.subr.mxu0 0.0
          %914 = vmatpush2.msra.mxu0 %v840
          %915 = vmatprep.subr.mxu0 0.0
          %916 = vmatpush2.msra.mxu0 %v839
          %917 = vmatprep.subr.mxu0 0.0
          %918 = vmatpush2.msra.mxu0 %v838
          %919 = vmatprep.subr.mxu0 0.0
          %920 = vmatpush2.msra.mxu0 %v837
          %921 = vmatprep.subr.mxu0 0.0
          %922 = vmatpush2.msra.mxu0 %v836
          %923 = vmatprep.mubr.f32.mxu0 %v819
          %924 = vmatmul.mubr.f32.gmra.mxu0 %v818
          %v925 = vpop.f32.mrf.mxu0
          %v926 = vadd.f32 %v857, %v925
          %v927 = vpop.f32.mrf.mxu0
          %928 = vdwg.mxu0
          %vm929 = vcmask 15360
          %v930 = vsel %vm929, %v926, -inf
          %931 = vmax.xlane.f32.xlu0 %v930
          %v932 = vpop.xlane.xlu0 %931
          %v933 = vsub.f32 %v926, %v932
          %v934 = vmul.f32 %v933, 1.442695
          %v935 = vpow.pop %v934
          %v936 = vsel %vm929, %v935, 0.0
          %937 = vadd.xlane.f32.xlu0 %v936
          %v938 = vpop.xlane.xlu0 %937
          %v939 = vlog2.pop %v938
          %v940 = vmul.f32 %v939, 0.6931472
          %v941 = vsub.f32 %v933, %v940
          %942 = vst.msk [vmem:[%s499] sm:$0xff] %vm929, %v941
        $region79: #{deepsynergy_forward.1} parent=66 // pred_fallthru
          _
        %p943 = scmp.lt.s32.totalorder %s22, 1
        %s944 = scalar_select %p943, %s22, 1
        %s945 = smul.addr %s944, 8
        %s946 = scalar_lea.vmem %s7, %s945
        // Predicated region
        $region80: #{deepsynergy_forward.1} parent=66 // pred_check
          %p947 = pneg %p215
        $region81: #{deepsynergy_forward.1} parent=66 // pred_check_branch
          %949 = sbr.rel (%p947) target = $region83
        $region82: #{deepsynergy_forward.1} parent=66 // pred_region
          _
        $region83: #{deepsynergy_forward.1} parent=66 // pred_fallthru
          _
      $region67: #{deepsynergy_forward.1} parent=5 // pred_fallthru
        _
      %p950 = scmp.le.s32.totalorder 2, %s13
      // Predicated region
      $region84: #{deepsynergy_forward.1} parent=5 // pred_check
        %p951 = pneg %p950
      $region85: #{deepsynergy_forward.1} parent=5 // pred_check_branch
        %953 = sbr.rel (%p951) target = $region87
      $region86: #{deepsynergy_forward.1} parent=5 // pred_region
        %s954 = ssub.s32 %s13, 2
        // Predicated region
        $region88: #{deepsynergy_forward.1} parent=86 // pred_check
          %p955 = pneg %p221
        $region89: #{deepsynergy_forward.1} parent=86 // pred_check_branch
          %957 = sbr.rel (%p955) target = $region91
        $region90: #{deepsynergy_forward.1} parent=86 // pred_region
          %p958 = scmp.lt.s32.totalorder %s24, 1
          %s959 = scalar_select %p958, %s24, 1
          %s960 = smul.addr %s959, 8
          %s961 = scalar_lea.vmem %s7, %s960
        $region91: #{deepsynergy_forward.1} parent=86 // pred_fallthru
          _
      $region87: #{deepsynergy_forward.1} parent=5 // pred_fallthru
        _
    $region6: #{deepsynergy_forward.1} parent=1 // loop_footer
      %s17 = sadd.s32 1, %s13
    $region7: #{deepsynergy_forward.1} parent=1 // loop_footer_branch
      %12 = sbr.rel target = $region3
    $region8: #{deepsynergy_forward.1} parent=1 // loop_exit
      _

</llo_original>
